<compile_context>
chip_gen: v7x
topology: tpu7x:2x2x1
jax: 0.10.0
libtpu: 0.0.40
codegen_flags: <defaults>
</compile_context>

<pallas_src>
import numpy as np
import jax
import jax.numpy as jnp
from jax import lax
from jax.experimental import pallas as pl
from jax.experimental.pallas import tpu as pltpu

# ---------------- small EEGNet configuration ----------------
N           = 2      # batch
C           = 8      # num_electrodes
T           = 64     # chunk_size
F1          = 4
D           = 2
F1D         = F1 * D           # 8
F2          = 8
K1          = 16     # kernel_1
K2          = 8      # kernel_2
NUM_CLASSES = 2
EPS         = 1e-3   # BatchNorm eps

PAD1 = K1 // 2                 # 8
TP   = T + 2 * PAD1            # 80  padded time length
W1   = TP - K1 + 1             # 65  block-1 conv width (PyTorch)
P1   = W1 // 4                 # 16  width after AvgPool(1,4)
W1T  = 4 * P1                  # 64  conv columns the pool actually consumes (trimmed)
PAD2 = K2 // 2                 # 4
PP   = P1 + 2 * PAD2           # 24  padded width inside block-2 (per sample)
W2   = PP - K2 + 1             # 17  width after block-2 depthwise conv
P2   = W2 // 8                 # 2   width after AvgPool(1,8)
FEAT = F2 * P2                 # 16  flattened feature dim

CK   = C * K1                  # 128 im2col rows = exact MXU contraction width
NW   = N * W1T                 # 128 batch-stacked block-1 output columns (1 lane tile)
NPP  = N * PP                  # 48  batch-stacked padded block-2 columns
BW   = 128                     # lane-padded block-2 working width (vreg-aligned, roll-safe)
NQ   = N * NUM_CLASSES * P2    # 8   (sample, class, pooled-pos) head columns
NOUT = N * NUM_CLASSES         # 4   flat logits

# Column layout of the packed per-channel constant slab `cst` (F1D x CST_W, f32).
CST_SHIFT = 0                  # fused block-1 BN shift              (1 col)
CST_W3    = 1                  # block-2 depthwise taps              (K2 cols)
CST_W4    = CST_W3 + K2        # pointwise conv weights              (F1D cols)
CST_S3    = CST_W4 + F1D       # BN3 scale                           (1 col)
CST_B3    = CST_S3 + 1         # BN3 shift                           (1 col)
CST_WH    = CST_B3 + 1         # head weights wlin[k, f*P2+p]        (NQ cols)
CST_W     = CST_WH + NQ        # 27


def _elu(v):
    # ELU(alpha=1); min() keeps exp() well-behaved on the unselected branch.
    return jnp.where(v > 0, v, jnp.exp(jnp.minimum(v, 0.0)) - 1.0)


# ---------------- Pallas kernel: full EEGNet forward for the whole batch ----------------
def eegnet_kernel(xc_ref, wf_ref, pb1_ref, cst_ref, pool_ref, out_ref):
    cst = cst_ref[...]                                               # (F1D, CST_W) f32

    # Block 1 fused: temporal conv . BN1 . depthwise spatial conv . BN2 as ONE MXU matmul.
    # (F1D, 128) bf16 @ (128, 128) bf16 -> f32.
    h2 = jnp.dot(wf_ref[...], xc_ref[...], preferred_element_type=jnp.float32)
    h2 = _elu(h2 + cst[:, CST_SHIFT:CST_SHIFT + 1])                  # fused BN shift, ELU

    # AvgPool(1,4) + block-2 zero padding folded into one matrix (bf16 operands, f32 acc).
    # (F1D, 128) @ (128, BW) -> (F1D, BW); only columns [n*PP, n*PP+PP) carry data.
    hp = jnp.dot(h2.astype(jnp.bfloat16), pb1_ref[...],
                 preferred_element_type=jnp.float32)

    # Block-2 depthwise temporal conv (per-channel 1xK2 kernel): K2 taps via XLU lane
    # rotations (roll by BW - j == roll by -j); wrapped-in lanes only land in columns
    # >= 48, which pb2h ignores.  Tap scales are per-row (F1D,1) VPU broadcasts in f32.
    w3 = cst[:, CST_W3:CST_W3 + K2]                                  # (F1D, K2)
    acc = w3[:, 0:1] * hp
    for j in range(1, K2):
        acc = acc + w3[:, j:j + 1] * pltpu.roll(hp, BW - j, axis=1)  # (F1D, BW)

    # Pointwise conv (bf16 MXU) + BN3 scale/shift + ELU (f32 VPU).
    w4 = cst[:, CST_W4:CST_W4 + F1D].astype(jnp.bfloat16)            # (F2, F1D)
    h4 = jnp.dot(w4, acc.astype(jnp.bfloat16),
                 preferred_element_type=jnp.float32)                 # (F2, BW)
    h4 = _elu(h4 * cst[:, CST_S3:CST_S3 + 1] + cst[:, CST_B3:CST_B3 + 1])

    # 2-D head: AvgPool(1,8) replicated per class -> (F2, NQ), elementwise multiply by the
    # 2-D head matrix, sublane sum, then a tiny (1,NQ)@(NQ,NOUT) selector matmul.
    pb2h = pool_ref[pl.ds(0, BW), :]                                 # (BW, NQ) bf16
    q = jnp.dot(h4.astype(jnp.bfloat16), pb2h,
                preferred_element_type=jnp.float32)                  # (F2, NQ)
    qw = q * cst[:, CST_WH:CST_WH + NQ]                              # (F2, NQ) f32
    r = jnp.sum(qw, axis=0, keepdims=True)                           # (1, NQ)
    sel = pool_ref[pl.ds(BW, NQ), pl.ds(0, NOUT)].astype(jnp.float32)  # (NQ, NOUT)
    out_ref[...] = jnp.dot(r, sel, preferred_element_type=jnp.float32)  # (1, NOUT)


# ---------------- wrapper / glue ----------------
def eegnet_forward(x, params):
    """x: (N, 1, C, T) float32 (NCHW like PyTorch). Returns (N, NUM_CLASSES) logits."""
    xs = x[:, 0, :, :]                                       # (N, C, T)
    xp = jnp.pad(xs, ((0, 0), (0, 0), (PAD1, PAD1)))         # (N, C, TP)
    # im2col trimmed to the W1T = 64 conv columns the 4-pool reads; rows ordered
    # (electrode c, tap j), columns ordered (sample n, time t).
    cols = jnp.stack([xp[:, :, j:j + W1T] for j in range(K1)], axis=2)   # (N, C, K1, W1T)
    xcol = cols.reshape(N, CK, W1T).transpose(1, 0, 2).reshape(CK, NW)
    xcol = xcol.astype(jnp.bfloat16)

    vmem = pl.BlockSpec(memory_space=pltpu.MemorySpace.VMEM)
    out = pl.pallas_call(
        eegnet_kernel,
        out_shape=jax.ShapeDtypeStruct((1, NOUT), jnp.float32),
        in_specs=[vmem] * 5,
        out_specs=vmem,
    )(xcol, params["wf_bf16"], params["pb1_bf16"], params["cst"], params["pool_head"])
    return out.reshape(N, NUM_CLASSES)


# ---------------- deterministic parameter initialization ----------------
def init_params(key):
    ks = jax.random.split(key, 20)

    def bn(kg, kb, km, kv, n):
        gamma = 1.0 + 0.1 * jax.random.normal(kg, (n,), jnp.float32)
        beta  = 0.1 * jax.random.normal(kb, (n,), jnp.float32)
        mean  = 0.1 * jax.random.normal(km, (n,), jnp.float32)
        var   = 0.5 + 0.3 * jnp.abs(jax.random.normal(kv, (n,), jnp.float32))
        scale = gamma / jnp.sqrt(var + EPS)
        shift = beta - mean * scale
        return scale, shift

    w1 = 0.3 * jax.random.normal(ks[0], (F1, 1, 1, K1), jnp.float32)
    bn1_s, bn1_b = bn(ks[1], ks[2], ks[3], ks[4], F1)

    w2 = 0.5 * jax.random.normal(ks[5], (F1D, 1, C, 1), jnp.float32)
    # Conv2dWithConstraint: torch.renorm(w, p=2, dim=0, maxnorm=1) applied to the weights.
    norms = jnp.sqrt(jnp.sum(w2 ** 2, axis=(1, 2, 3)))
    factor = jnp.where(norms > 1.0, 1.0 / (norms + 1e-7), 1.0)
    w2r = w2 * factor[:, None, None, None]
    bn2_s, bn2_b = bn(ks[6], ks[7], ks[8], ks[9], F1D)

    w3 = 0.3 * jax.random.normal(ks[10], (F1D, 1, 1, K2), jnp.float32)
    w4 = 0.3 * jax.random.normal(ks[11], (F2, F1D, 1, 1), jnp.float32)
    bn3_s, bn3_b = bn(ks[12], ks[13], ks[14], ks[15], F2)

    wlin = 0.3 * jax.random.normal(ks[16], (NUM_CLASSES, FEAT), jnp.float32)

    # ---- kernel-ready (host-precomputed) constants ----
    w1k    = np.asarray(w1[:, 0, 0, :])          # (F1, K1)
    w2flat = np.asarray(w2r[:, 0, :, 0])         # (F1D, C)
    s1 = np.asarray(bn1_s); b1 = np.asarray(bn1_b)
    s2 = np.asarray(bn2_s); b2 = np.asarray(bn2_b)
    g = np.arange(F1D) // D                      # group of each depthwise spatial filter

    # Fused block-1 weight: Wf[d, c*K1+j] = w2[d,c] * w1[g(d),j] * bn1_s[g(d)] * bn2_s[d]
    wfused = (w2flat[:, :, None] * w1k[g][:, None, :] *
              (s1[g] * s2)[:, None, None]).reshape(F1D, CK).astype(np.float32)
    # Fused shift: (bn1_b[g(d)] * sum_c w2[d,c]) * bn2_s[d] + bn2_b[d]
    shiftf = (b1[g] * w2flat.sum(axis=1) * s2 + b2).astype(np.float32)   # (F1D,)

    # AvgPool(1,4) + block-2 zero padding, block-diagonal over the batch with per-sample
    # stride W1T=64; lane-padded to BW=128 output columns (extras are structural zeros).
    pb1 = np.zeros((NW, BW), np.float32)
    for n in range(N):
        for p in range(P1):
            pb1[n * W1T + 4 * p: n * W1T + 4 * p + 4, n * PP + PAD2 + p] = 0.25

    # Packed per-channel constant slab (F1D rows, f32).
    w3k = np.asarray(w3[:, 0, 0, :])             # (F1D, K2)
    w4m = np.asarray(w4[:, :, 0, 0])             # (F2, F1D)
    wl3 = np.asarray(wlin).reshape(NUM_CLASSES, F2, P2)
    wh2d = np.zeros((F2, NQ), np.float32)        # wh2d[f,(n*NC+k)*P2+p] = wlin[k, f*P2+p]
    for n in range(N):
        for k in range(NUM_CLASSES):
            for p in range(P2):
                wh2d[:, (n * NUM_CLASSES + k) * P2 + p] = wl3[k, :, p]
    cst = np.zeros((F1D, CST_W), np.float32)
    cst[:, CST_SHIFT] = shiftf
    cst[:, CST_W3:CST_W3 + K2] = w3k
    cst[:, CST_W4:CST_W4 + F1D] = w4m
    cst[:, CST_S3] = np.asarray(bn3_s)
    cst[:, CST_B3] = np.asarray(bn3_b)
    cst[:, CST_WH:CST_WH + NQ] = wh2d

    # AvgPool(1,8) replicated per class (rows 0..BW-1; rows >= NPP stay zero and kill the
    # padded block-2 columns) stacked with the (NQ, NOUT) class selector (rows BW..BW+NQ-1).
    pool_head = np.zeros((BW + NQ, NQ), np.float32)
    for n in range(N):
        for k in range(NUM_CLASSES):
            for p in range(P2):
                col = (n * NUM_CLASSES + k) * P2 + p
                pool_head[n * PP + 8 * p: n * PP + 8 * p + 8, col] = 0.125
                pool_head[BW + col, n * NUM_CLASSES + k] = 1.0

    return dict(
        # raw parameters (used by the pure-JAX reference)
        w1=w1, w2r=w2r, w3=w3, w4=w4, wlin=wlin,
        bn1_s=bn1_s, bn1_b=bn1_b, bn2_s=bn2_s, bn2_b=bn2_b, bn3_s=bn3_s, bn3_b=bn3_b,
        # kernel-ready packed operands
        wf_bf16=jnp.asarray(wfused, dtype=jnp.bfloat16),
        pb1_bf16=jnp.asarray(pb1, dtype=jnp.bfloat16),
        cst=jnp.asarray(cst),
        pool_head=jnp.asarray(pool_head, dtype=jnp.bfloat16),
    )


# ---------------- pure-JAX reference (eval semantics) ----------------
def eegnet_reference(x, p):
    dn = ('NCHW', 'OIHW', 'NCHW')
    h = lax.conv_general_dilated(x, p["w1"], (1, 1), ((0, 0), (PAD1, PAD1)),
                                 dimension_numbers=dn)
    h = h * p["bn1_s"][None, :, None, None] + p["bn1_b"][None, :, None, None]
    h = lax.conv_general_dilated(h, p["w2r"], (1, 1), ((0, 0), (0, 0)),
                                 dimension_numbers=dn, feature_group_count=F1)
    h = h * p["bn2_s"][None, :, None, None] + p["bn2_b"][None, :, None, None]
    h = _elu(h)
    n1 = h.shape[3] // 4
    h = h[..., :n1 * 4].reshape(h.shape[0], h.shape[1], 1, n1, 4).mean(-1)
    h = lax.conv_general_dilated(h, p["w3"], (1, 1), ((0, 0), (PAD2, PAD2)),
                                 dimension_numbers=dn, feature_group_count=F1D)
    h = lax.conv_general_dilated(h, p["w4"], (1, 1), ((0, 0), (0, 0)),
                                 dimension_numbers=dn)
    h = h * p["bn3_s"][None, :, None, None] + p["bn3_b"][None, :, None, None]
    h = _elu(h)
    n2 = h.shape[3] // 8
    h = h[..., :n2 * 8].reshape(h.shape[0], h.shape[1], 1, n2, 8).mean(-1)
    feat = h.reshape(h.shape[0], -1)
    return feat @ p["wlin"].T


if __name__ == "__main__":
    key = jax.random.PRNGKey(0)
    pkey, xkey = jax.random.split(key)
    params = init_params(pkey)
    x = jax.random.normal(xkey, (N, 1, C, T), jnp.float32)

    fwd = jax.jit(eegnet_forward)
    out = jax.block_until_ready(fwd(x, params))
    assert out.shape == (N, NUM_CLASSES)

    ref = np.asarray(eegnet_reference(x, params))
    got = np.asarray(out)
    # bf16 MXU operands (block-1 im2col/weights + pooling/pointwise matmuls) are a
    # deliberate accuracy tradeoff (per review); elementwise math stays f32.
    if not np.allclose(got, ref, rtol=4e-2, atol=4e-2):
        raise AssertionError(
            f"Pallas kernel mismatch vs reference, max abs diff = {np.max(np.abs(got - ref))}")
    print("KERNEL_OK")
</pallas_src>

<mosaic_0001>
module attributes {stable_mosaic.version = 11 : i64} {
  func.func @eegnet_kernel(%arg0: memref<128x128xbf16, #tpu.memory_space<vmem>>, %arg1: memref<8x128xbf16, #tpu.memory_space<vmem>>, %arg2: memref<128x128xbf16, #tpu.memory_space<vmem>>, %arg3: memref<8x27xf32, #tpu.memory_space<vmem>>, %arg4: memref<136x8xbf16, #tpu.memory_space<vmem>>, %arg5: memref<1x4xf32, #tpu.memory_space<vmem>>) attributes {dimension_semantics = [], scalar_prefetch = 0 : i64, scratch_operands = 0 : i64, tpu.core_type = #tpu.core_type<tc>} {
    %c0 = arith.constant 0 : index
    %c0_0 = arith.constant 0 : index
    %0 = vector.load %arg3[%c0, %c0_0] : memref<8x27xf32, #tpu.memory_space<vmem>>, vector<8x27xf32>
    %c0_1 = arith.constant 0 : index
    %c0_2 = arith.constant 0 : index
    %1 = vector.load %arg1[%c0_1, %c0_2] : memref<8x128xbf16, #tpu.memory_space<vmem>>, vector<8x128xbf16>
    %c0_3 = arith.constant 0 : index
    %c0_4 = arith.constant 0 : index
    %2 = vector.load %arg0[%c0_3, %c0_4] : memref<128x128xbf16, #tpu.memory_space<vmem>>, vector<128x128xbf16>
    %cst = arith.constant dense<0.000000e+00> : vector<8x128xf32>
    %3 = tpu.matmul %1, %2, %cst {dimension_numbers = #tpu.dot_dimension_numbers<[1], [0], [0], [1], [0, 0, 1, 1], [], []>} : vector<8x128xbf16>, vector<128x128xbf16>, vector<8x128xf32> -> vector<8x128xf32>
    %4 = vector.extract_strided_slice %0 {offsets = [0, 0], sizes = [8, 1], strides = [1, 1]} : vector<8x27xf32> to vector<8x1xf32>
    %5 = vector.broadcast %4 : vector<8x1xf32> to vector<8x128xf32>
    %6 = arith.addf %3, %5 : vector<8x128xf32>
    %cst_5 = arith.constant 0.000000e+00 : f32
    %7 = vector.broadcast %cst_5 : f32 to vector<8x128xf32>
    %8 = arith.cmpf ogt, %6, %7 : vector<8x128xf32>
    %cst_6 = arith.constant 0.000000e+00 : f32
    %9 = vector.broadcast %cst_6 : f32 to vector<8x128xf32>
    %10 = arith.minimumf %6, %9 : vector<8x128xf32>
    %11 = math.exp %10 : vector<8x128xf32>
    %cst_7 = arith.constant 1.000000e+00 : f32
    %12 = vector.broadcast %cst_7 : f32 to vector<8x128xf32>
    %13 = arith.subf %11, %12 : vector<8x128xf32>
    %14 = arith.select %8, %6, %13 : vector<8x128xi1>, vector<8x128xf32>
    %15 = arith.truncf %14 : vector<8x128xf32> to vector<8x128xbf16>
    %c0_8 = arith.constant 0 : index
    %c0_9 = arith.constant 0 : index
    %16 = vector.load %arg2[%c0_8, %c0_9] : memref<128x128xbf16, #tpu.memory_space<vmem>>, vector<128x128xbf16>
    %cst_10 = arith.constant dense<0.000000e+00> : vector<8x128xf32>
    %17 = tpu.matmul %15, %16, %cst_10 {dimension_numbers = #tpu.dot_dimension_numbers<[1], [0], [0], [1], [0, 0, 1, 1], [], []>} : vector<8x128xbf16>, vector<128x128xbf16>, vector<8x128xf32> -> vector<8x128xf32>
    %18 = vector.extract_strided_slice %0 {offsets = [0, 1], sizes = [8, 8], strides = [1, 1]} : vector<8x27xf32> to vector<8x8xf32>
    %19 = vector.extract_strided_slice %18 {offsets = [0, 0], sizes = [8, 1], strides = [1, 1]} : vector<8x8xf32> to vector<8x1xf32>
    %20 = vector.broadcast %19 : vector<8x1xf32> to vector<8x128xf32>
    %21 = arith.mulf %20, %17 : vector<8x128xf32>
    %22 = vector.extract_strided_slice %18 {offsets = [0, 1], sizes = [8, 1], strides = [1, 1]} : vector<8x8xf32> to vector<8x1xf32>
    %c127_i32 = arith.constant 127 : i32
    %23 = tpu.dynamic_rotate %17 by %c127_i32 dim 1 : vector<8x128xf32>, i32 -> vector<8x128xf32>
    %24 = vector.broadcast %22 : vector<8x1xf32> to vector<8x128xf32>
    %25 = arith.mulf %24, %23 : vector<8x128xf32>
    %26 = arith.addf %21, %25 : vector<8x128xf32>
    %27 = vector.extract_strided_slice %18 {offsets = [0, 2], sizes = [8, 1], strides = [1, 1]} : vector<8x8xf32> to vector<8x1xf32>
    %c126_i32 = arith.constant 126 : i32
    %28 = tpu.dynamic_rotate %17 by %c126_i32 dim 1 : vector<8x128xf32>, i32 -> vector<8x128xf32>
    %29 = vector.broadcast %27 : vector<8x1xf32> to vector<8x128xf32>
    %30 = arith.mulf %29, %28 : vector<8x128xf32>
    %31 = arith.addf %26, %30 : vector<8x128xf32>
    %32 = vector.extract_strided_slice %18 {offsets = [0, 3], sizes = [8, 1], strides = [1, 1]} : vector<8x8xf32> to vector<8x1xf32>
    %c125_i32 = arith.constant 125 : i32
    %33 = tpu.dynamic_rotate %17 by %c125_i32 dim 1 : vector<8x128xf32>, i32 -> vector<8x128xf32>
    %34 = vector.broadcast %32 : vector<8x1xf32> to vector<8x128xf32>
    %35 = arith.mulf %34, %33 : vector<8x128xf32>
    %36 = arith.addf %31, %35 : vector<8x128xf32>
    %37 = vector.extract_strided_slice %18 {offsets = [0, 4], sizes = [8, 1], strides = [1, 1]} : vector<8x8xf32> to vector<8x1xf32>
    %c124_i32 = arith.constant 124 : i32
    %38 = tpu.dynamic_rotate %17 by %c124_i32 dim 1 : vector<8x128xf32>, i32 -> vector<8x128xf32>
    %39 = vector.broadcast %37 : vector<8x1xf32> to vector<8x128xf32>
    %40 = arith.mulf %39, %38 : vector<8x128xf32>
    %41 = arith.addf %36, %40 : vector<8x128xf32>
    %42 = vector.extract_strided_slice %18 {offsets = [0, 5], sizes = [8, 1], strides = [1, 1]} : vector<8x8xf32> to vector<8x1xf32>
    %c123_i32 = arith.constant 123 : i32
    %43 = tpu.dynamic_rotate %17 by %c123_i32 dim 1 : vector<8x128xf32>, i32 -> vector<8x128xf32>
    %44 = vector.broadcast %42 : vector<8x1xf32> to vector<8x128xf32>
    %45 = arith.mulf %44, %43 : vector<8x128xf32>
    %46 = arith.addf %41, %45 : vector<8x128xf32>
    %47 = vector.extract_strided_slice %18 {offsets = [0, 6], sizes = [8, 1], strides = [1, 1]} : vector<8x8xf32> to vector<8x1xf32>
    %c122_i32 = arith.constant 122 : i32
    %48 = tpu.dynamic_rotate %17 by %c122_i32 dim 1 : vector<8x128xf32>, i32 -> vector<8x128xf32>
    %49 = vector.broadcast %47 : vector<8x1xf32> to vector<8x128xf32>
    %50 = arith.mulf %49, %48 : vector<8x128xf32>
    %51 = arith.addf %46, %50 : vector<8x128xf32>
    %52 = vector.extract_strided_slice %18 {offsets = [0, 7], sizes = [8, 1], strides = [1, 1]} : vector<8x8xf32> to vector<8x1xf32>
    %c121_i32 = arith.constant 121 : i32
    %53 = tpu.dynamic_rotate %17 by %c121_i32 dim 1 : vector<8x128xf32>, i32 -> vector<8x128xf32>
    %54 = vector.broadcast %52 : vector<8x1xf32> to vector<8x128xf32>
    %55 = arith.mulf %54, %53 : vector<8x128xf32>
    %56 = arith.addf %51, %55 : vector<8x128xf32>
    %57 = vector.extract_strided_slice %0 {offsets = [0, 9], sizes = [8, 8], strides = [1, 1]} : vector<8x27xf32> to vector<8x8xf32>
    %58 = arith.truncf %57 : vector<8x8xf32> to vector<8x8xbf16>
    %59 = arith.truncf %56 : vector<8x128xf32> to vector<8x128xbf16>
    %cst_11 = arith.constant dense<0.000000e+00> : vector<8x128xf32>
    %60 = tpu.matmul %58, %59, %cst_11 {dimension_numbers = #tpu.dot_dimension_numbers<[1], [0], [0], [1], [0, 0, 1, 1], [], []>} : vector<8x8xbf16>, vector<8x128xbf16>, vector<8x128xf32> -> vector<8x128xf32>
    %61 = vector.extract_strided_slice %0 {offsets = [0, 17], sizes = [8, 1], strides = [1, 1]} : vector<8x27xf32> to vector<8x1xf32>
    %62 = vector.broadcast %61 : vector<8x1xf32> to vector<8x128xf32>
    %63 = arith.mulf %60, %62 : vector<8x128xf32>
    %64 = vector.extract_strided_slice %0 {offsets = [0, 18], sizes = [8, 1], strides = [1, 1]} : vector<8x27xf32> to vector<8x1xf32>
    %65 = vector.broadcast %64 : vector<8x1xf32> to vector<8x128xf32>
    %66 = arith.addf %63, %65 : vector<8x128xf32>
    %cst_12 = arith.constant 0.000000e+00 : f32
    %67 = vector.broadcast %cst_12 : f32 to vector<8x128xf32>
    %68 = arith.cmpf ogt, %66, %67 : vector<8x128xf32>
    %cst_13 = arith.constant 0.000000e+00 : f32
    %69 = vector.broadcast %cst_13 : f32 to vector<8x128xf32>
    %70 = arith.minimumf %66, %69 : vector<8x128xf32>
    %71 = math.exp %70 : vector<8x128xf32>
    %cst_14 = arith.constant 1.000000e+00 : f32
    %72 = vector.broadcast %cst_14 : f32 to vector<8x128xf32>
    %73 = arith.subf %71, %72 : vector<8x128xf32>
    %74 = arith.select %68, %66, %73 : vector<8x128xi1>, vector<8x128xf32>
    %c0_15 = arith.constant 0 : index
    %c0_16 = arith.constant 0 : index
    %75 = vector.load %arg4[%c0_15, %c0_16] : memref<136x8xbf16, #tpu.memory_space<vmem>>, vector<128x8xbf16>
    %76 = arith.truncf %74 : vector<8x128xf32> to vector<8x128xbf16>
    %cst_17 = arith.constant dense<0.000000e+00> : vector<8x8xf32>
    %77 = tpu.matmul %76, %75, %cst_17 {dimension_numbers = #tpu.dot_dimension_numbers<[1], [0], [0], [1], [0, 0, 1, 1], [], []>} : vector<8x128xbf16>, vector<128x8xbf16>, vector<8x8xf32> -> vector<8x8xf32>
    %78 = vector.extract_strided_slice %0 {offsets = [0, 19], sizes = [8, 8], strides = [1, 1]} : vector<8x27xf32> to vector<8x8xf32>
    %79 = arith.mulf %77, %78 : vector<8x8xf32>
    %cst_18 = arith.constant dense<0.000000e+00> : vector<8xf32>
    %80 = vector.multi_reduction <add>, %79, %cst_18 [0] : vector<8x8xf32> to vector<8xf32>
    %81 = vector.shape_cast %80 : vector<8xf32> to vector<1x8xf32>
    %c128 = arith.constant 128 : index
    %c0_19 = arith.constant 0 : index
    %82 = vector.load %arg4[%c128, %c0_19] : memref<136x8xbf16, #tpu.memory_space<vmem>>, vector<8x4xbf16>
    %83 = arith.extf %82 : vector<8x4xbf16> to vector<8x4xf32>
    %cst_20 = arith.constant dense<0.000000e+00> : vector<1x4xf32>
    %84 = tpu.matmul %81, %83, %cst_20 {dimension_numbers = #tpu.dot_dimension_numbers<[1], [0], [0], [1], [0, 0, 1, 1], [], []>} : vector<1x8xf32>, vector<8x4xf32>, vector<1x4xf32> -> vector<1x4xf32>
    %c0_21 = arith.constant 0 : index
    %c0_22 = arith.constant 0 : index
    %85 = vector.load %arg5[%c0_21, %c0_22] : memref<1x4xf32, #tpu.memory_space<vmem>>, vector<1x4xf32>
    tpu.vector_store %arg5[%c0_21, %c0_22], %84 {strides = array<i32>} : memref<1x4xf32, #tpu.memory_space<vmem>>, vector<1x4xf32>,
    return
  }
}

</mosaic_0001>

<llo_original>
// kernel: eegnet_forward.1
$region0: #{eegnet_forward.1}
  #allocation0 [shape = 'u32[]', space=smem, size = 0x4, offset = 0x4, fixed_abs, tag = 'smem constant byte address 0x4 - core index']
  #allocation1 [shape = 'u32[144,128]{1,0:T(1,128)}', space=vmem, size = 0x12000, scoped, tag = 'internal scratch']
  %s0 = inlined_call_operand.vmem [shape: bf16[128,128], index: 0, kind: input, shape index: {}]
  %s1 = inlined_call_operand.vmem [shape: bf16[8,128], index: 1, kind: input, shape index: {}]
  %s2 = inlined_call_operand.vmem [shape: bf16[128,128], index: 2, kind: input, shape index: {}]
  %s3 = inlined_call_operand.vmem [shape: f32[8,27], index: 3, kind: input, shape index: {}]
  %s4 = inlined_call_operand.vmem [shape: bf16[136,8], index: 4, kind: input, shape index: {}]
  %s5 = inlined_call_operand.vmem [shape: f32[1,4], index: 5, kind: output, shape index: {}]
  %s6 = sld [smem:[#allocation0]]
  $region30: #{eegnet_forward.1} parent=0
    _
  %s8 = ssub.s32 1, %s6
  %s9 = scalar_select 0, %s8, %s6
  // Predicated region
  $region2: #{eegnet_forward.1} parent=0 // pred_check
    _
  $region3: #{eegnet_forward.1} parent=0 // pred_check_branch
    %11 = sbr.rel (0) target = $region5
  $region4: #{eegnet_forward.1} parent=0 // pred_region
    _
  $region5: #{eegnet_forward.1} parent=0 // pred_fallthru
    _
  // Predicated region
  $region6: #{eegnet_forward.1} parent=0 // pred_check
    _
  $region7: #{eegnet_forward.1} parent=0 // pred_check_branch
    %13 = sbr.rel (0) target = $region9
  $region8: #{eegnet_forward.1} parent=0 // pred_region
    _
  $region9: #{eegnet_forward.1} parent=0 // pred_fallthru
    _
  // Predicated region
  $region10: #{eegnet_forward.1} parent=0 // pred_check
    _
  $region11: #{eegnet_forward.1} parent=0 // pred_check_branch
    %15 = sbr.rel (0) target = $region13
  $region12: #{eegnet_forward.1} parent=0 // pred_region
    _
  $region13: #{eegnet_forward.1} parent=0 // pred_fallthru
    _
  // Predicated region
  $region14: #{eegnet_forward.1} parent=0 // pred_check
    _
  $region15: #{eegnet_forward.1} parent=0 // pred_check_branch
    %17 = sbr.rel (0) target = $region17
  $region16: #{eegnet_forward.1} parent=0 // pred_region
    _
  $region17: #{eegnet_forward.1} parent=0 // pred_fallthru
    _
  // Predicated region
  $region18: #{eegnet_forward.1} parent=0 // pred_check
    _
  $region19: #{eegnet_forward.1} parent=0 // pred_check_branch
    %19 = sbr.rel (0) target = $region21
  $region20: #{eegnet_forward.1} parent=0 // pred_region
    _
  $region21: #{eegnet_forward.1} parent=0 // pred_fallthru
    _
  %v21 = vld [vmem:[%s3] sm:$0xff]
  %v22 = vld [vmem:[%s1] sm:$0xf]
  %v23 = vld [vmem:[%s0] sm:$0xf]
  %v24 = vld [vmem:[%s0 + $0x4] sm:$0xf]
  %v25 = vld [vmem:[%s0 + $0x8] sm:$0xf]
  %v26 = vld [vmem:[%s0 + $0xc] sm:$0xf]
  %v27 = vld [vmem:[%s0 + $0x10] sm:$0xf]
  %v28 = vld [vmem:[%s0 + $0x14] sm:$0xf]
  %v29 = vld [vmem:[%s0 + $0x18] sm:$0xf]
  %v30 = vld [vmem:[%s0 + $0x1c] sm:$0xf]
  %v31 = vld [vmem:[%s0 + $0x20] sm:$0xf]
  %v32 = vld [vmem:[%s0 + $0x24] sm:$0xf]
  %v33 = vld [vmem:[%s0 + $0x28] sm:$0xf]
  %v34 = vld [vmem:[%s0 + $0x2c] sm:$0xf]
  %v35 = vld [vmem:[%s0 + $0x30] sm:$0xf]
  %v36 = vld [vmem:[%s0 + $0x34] sm:$0xf]
  %v37 = vld [vmem:[%s0 + $0x38] sm:$0xf]
  %v38 = vld [vmem:[%s0 + $0x3c] sm:$0xf]
  %40 = vset.pattern.permute.xlu0 0
  %41 = vperm.xlu0 %40, %v21
  %v42 = vpop.permute.xlu0 %41
  %v60 = vunpack.c.l.b16 %v23
  %v61 = vunpack.c.l.b16 %v24
  %v62 = vunpack.c.l.b16 %v25
  %v63 = vunpack.c.l.b16 %v26
  %v64 = vunpack.c.l.b16 %v27
  %v65 = vunpack.c.l.b16 %v28
  %v66 = vunpack.c.l.b16 %v29
  %v67 = vunpack.c.l.b16 %v30
  %v68 = vunpack.c.l.b16 %v31
  %v69 = vunpack.c.l.b16 %v32
  %v70 = vunpack.c.l.b16 %v33
  %v71 = vunpack.c.l.b16 %v34
  %v72 = vunpack.c.l.b16 %v35
  %v73 = vunpack.c.l.b16 %v36
  %v74 = vunpack.c.l.b16 %v37
  %v75 = vunpack.c.l.b16 %v38
  %v76 = vpack.c.b16 %v61, %v60
  %v77 = vpack.c.b16 %v63, %v62
  %v78 = vpack.c.b16 %v65, %v64
  %v79 = vpack.c.b16 %v67, %v66
  %v80 = vpack.c.b16 %v69, %v68
  %v81 = vpack.c.b16 %v71, %v70
  %v82 = vpack.c.b16 %v73, %v72
  %v83 = vpack.c.b16 %v75, %v74
  %92 = vmatprep.subr.bf16.mxu0 0
  %93 = vmatpush1.bf16.msra.mxu0 %v76
  %94 = vmatprep.subr.bf16.mxu0 0
  %95 = vmatpush1.bf16.msra.mxu0 %v77
  %96 = vmatprep.subr.bf16.mxu0 0
  %97 = vmatpush1.bf16.msra.mxu0 %v78
  %98 = vmatprep.subr.bf16.mxu0 0
  %99 = vmatpush1.bf16.msra.mxu0 %v79
  %100 = vmatprep.subr.bf16.mxu0 0
  %101 = vmatpush1.bf16.msra.mxu0 %v80
  %102 = vmatprep.subr.bf16.mxu0 0
  %103 = vmatpush1.bf16.msra.mxu0 %v81
  %104 = vmatprep.subr.bf16.mxu0 0
  %105 = vmatpush1.bf16.msra.mxu0 %v82
  %106 = vmatprep.subr.bf16.mxu0 0
  %107 = vmatpush1.bf16.msra.mxu0 %v83
  %108 = vmatprep.subr.bf16.mxu0 0
  %109 = vmatpush1.bf16.msra.mxu0 0
  %110 = vmatprep.subr.bf16.mxu0 0
  %111 = vmatpush1.bf16.msra.mxu0 0
  %112 = vmatprep.subr.bf16.mxu0 0
  %113 = vmatpush1.bf16.msra.mxu0 0
  %114 = vmatprep.subr.bf16.mxu0 0
  %115 = vmatpush1.bf16.msra.mxu0 0
  %116 = vmatprep.subr.bf16.mxu0 0
  %117 = vmatpush1.bf16.msra.mxu0 0
  %118 = vmatprep.subr.bf16.mxu0 0
  %119 = vmatpush1.bf16.msra.mxu0 0
  %120 = vmatprep.subr.bf16.mxu0 0
  %121 = vmatpush1.bf16.msra.mxu0 0
  %122 = vmatprep.subr.bf16.mxu0 0
  %123 = vmatpush1.bf16.msra.mxu0 0
  %124 = vmatprep.mubr.bf16.mxu0 0
  %125 = vmatmul.mubr.bf16.gmra.mrb[0].mxu0 %v22
  %v126 = vpop.f32.mrb[0].mxu0
  %v127 = vadd.f32 %v42, %v126
  %v128 = vpop.f32.mrb[0].mxu0
  %v129 = vpop.f32.mrb[0].mxu0
  %v130 = vpop.f32.mrb[0].mxu0
  %131 = vdwg.mxu0
  %vm132 = vcmp.gt.f32.partialorder %v127, 0.0
  %v133 = vmin.f32 %v127, 0.0
  %v134 = vmul.f32 %v133, 1.442695
  %v135 = vpow.pop %v134
  %v136 = vsub.f32 %v135, 1.0
  %v137 = vsel %vm132, %v127, %v136
  %v138 = vpack.c.bf16 %v137, %v137
  %v139 = vld [vmem:[%s2] sm:$0xf]
  %v140 = vld [vmem:[%s2 + $0x4] sm:$0xf]
  %v141 = vld [vmem:[%s2 + $0x8] sm:$0xf]
  %v142 = vld [vmem:[%s2 + $0xc] sm:$0xf]
  %v143 = vld [vmem:[%s2 + $0x10] sm:$0xf]
  %v144 = vld [vmem:[%s2 + $0x14] sm:$0xf]
  %v145 = vld [vmem:[%s2 + $0x18] sm:$0xf]
  %v146 = vld [vmem:[%s2 + $0x1c] sm:$0xf]
  %v147 = vld [vmem:[%s2 + $0x20] sm:$0xf]
  %v148 = vld [vmem:[%s2 + $0x24] sm:$0xf]
  %v149 = vld [vmem:[%s2 + $0x28] sm:$0xf]
  %v150 = vld [vmem:[%s2 + $0x2c] sm:$0xf]
  %v151 = vld [vmem:[%s2 + $0x30] sm:$0xf]
  %v152 = vld [vmem:[%s2 + $0x34] sm:$0xf]
  %v153 = vld [vmem:[%s2 + $0x38] sm:$0xf]
  %v154 = vld [vmem:[%s2 + $0x3c] sm:$0xf]
  %v171 = vunpack.c.l.b16 %v139
  %v172 = vunpack.c.l.b16 %v140
  %v173 = vunpack.c.l.b16 %v141
  %v174 = vunpack.c.l.b16 %v142
  %v175 = vunpack.c.l.b16 %v143
  %v176 = vunpack.c.l.b16 %v144
  %v177 = vunpack.c.l.b16 %v145
  %v178 = vunpack.c.l.b16 %v146
  %v179 = vunpack.c.l.b16 %v147
  %v180 = vunpack.c.l.b16 %v148
  %v181 = vunpack.c.l.b16 %v149
  %v182 = vunpack.c.l.b16 %v150
  %v183 = vunpack.c.l.b16 %v151
  %v184 = vunpack.c.l.b16 %v152
  %v185 = vunpack.c.l.b16 %v153
  %v186 = vunpack.c.l.b16 %v154
  %v187 = vpack.c.b16 %v172, %v171
  %v188 = vpack.c.b16 %v174, %v173
  %v189 = vpack.c.b16 %v176, %v175
  %v190 = vpack.c.b16 %v178, %v177
  %v191 = vpack.c.b16 %v180, %v179
  %v192 = vpack.c.b16 %v182, %v181
  %v193 = vpack.c.b16 %v184, %v183
  %v194 = vpack.c.b16 %v186, %v185
  %203 = vmatprep.subr.bf16.mxu0 0
  %204 = vmatpush1.bf16.msra.mxu0 %v187
  %205 = vmatprep.subr.bf16.mxu0 0
  %206 = vmatpush1.bf16.msra.mxu0 %v188
  %207 = vmatprep.subr.bf16.mxu0 0
  %208 = vmatpush1.bf16.msra.mxu0 %v189
  %209 = vmatprep.subr.bf16.mxu0 0
  %210 = vmatpush1.bf16.msra.mxu0 %v190
  %211 = vmatprep.subr.bf16.mxu0 0
  %212 = vmatpush1.bf16.msra.mxu0 %v191
  %213 = vmatprep.subr.bf16.mxu0 0
  %214 = vmatpush1.bf16.msra.mxu0 %v192
  %215 = vmatprep.subr.bf16.mxu0 0
  %216 = vmatpush1.bf16.msra.mxu0 %v193
  %217 = vmatprep.subr.bf16.mxu0 0
  %218 = vmatpush1.bf16.msra.mxu0 %v194
  %219 = vmatprep.subr.bf16.mxu0 0
  %220 = vmatpush1.bf16.msra.mxu0 0
  %221 = vmatprep.subr.bf16.mxu0 0
  %222 = vmatpush1.bf16.msra.mxu0 0
  %223 = vmatprep.subr.bf16.mxu0 0
  %224 = vmatpush1.bf16.msra.mxu0 0
  %225 = vmatprep.subr.bf16.mxu0 0
  %226 = vmatpush1.bf16.msra.mxu0 0
  %227 = vmatprep.subr.bf16.mxu0 0
  %228 = vmatpush1.bf16.msra.mxu0 0
  %229 = vmatprep.subr.bf16.mxu0 0
  %230 = vmatpush1.bf16.msra.mxu0 0
  %231 = vmatprep.subr.bf16.mxu0 0
  %232 = vmatpush1.bf16.msra.mxu0 0
  %233 = vmatprep.subr.bf16.mxu0 0
  %234 = vmatpush1.bf16.msra.mxu0 0
  %235 = vmatprep.mubr.bf16.mxu0 0
  %236 = vmatmul.mubr.bf16.gmra.mrb[0].mxu0 %v138
  %v237 = vpop.f32.mrb[0].mxu0
  %v238 = vadd.f32 0.0, %v237
  %v239 = vpop.f32.mrb[0].mxu0
  %v240 = vpop.f32.mrb[0].mxu0
  %v241 = vpop.f32.mrb[0].mxu0
  %242 = vdwg.mxu0
  %243 = vset.pattern.permute.xlu0 1
  %244 = vperm.xlu0 %243, %v21
  %v245 = vpop.permute.xlu0 %244
  %v247 = vmul.f32 %v245, %v238
  %248 = vrot.lane.b32.xlu0 %v238, 127
  %v249 = vpop.permute.xlu0 %248
  %250 = vset.pattern.permute.xlu0 2
  %251 = vperm.xlu0 %250, %v21
  %v252 = vpop.permute.xlu0 %251
  %v254 = vmul.f32 %v252, %v249
  %v255 = vadd.f32 %v247, %v254
  %256 = vrot.lane.b32.xlu0 %v238, 126
  %v257 = vpop.permute.xlu0 %256
  %258 = vset.pattern.permute.xlu0 3
  %259 = vperm.xlu0 %258, %v21
  %v260 = vpop.permute.xlu0 %259
  %v262 = vmul.f32 %v260, %v257
  %v263 = vadd.f32 %v255, %v262
  %264 = vrot.lane.b32.xlu0 %v238, 125
  %v265 = vpop.permute.xlu0 %264
  %266 = vset.pattern.permute.xlu0 4
  %267 = vperm.xlu0 %266, %v21
  %v268 = vpop.permute.xlu0 %267
  %v270 = vmul.f32 %v268, %v265
  %v271 = vadd.f32 %v263, %v270
  %272 = vrot.lane.b32.xlu0 %v238, 124
  %v273 = vpop.permute.xlu0 %272
  %274 = vset.pattern.permute.xlu0 5
  %275 = vperm.xlu0 %274, %v21
  %v276 = vpop.permute.xlu0 %275
  %v278 = vmul.f32 %v276, %v273
  %v279 = vadd.f32 %v271, %v278
  %280 = vrot.lane.b32.xlu0 %v238, 123
  %v281 = vpop.permute.xlu0 %280
  %282 = vset.pattern.permute.xlu0 6
  %283 = vperm.xlu0 %282, %v21
  %v284 = vpop.permute.xlu0 %283
  %v286 = vmul.f32 %v284, %v281
  %v287 = vadd.f32 %v279, %v286
  %288 = vrot.lane.b32.xlu0 %v238, 122
  %v289 = vpop.permute.xlu0 %288
  %290 = vset.pattern.permute.xlu0 7
  %291 = vperm.xlu0 %290, %v21
  %v292 = vpop.permute.xlu0 %291
  %v294 = vmul.f32 %v292, %v289
  %v295 = vadd.f32 %v287, %v294
  %296 = vrot.lane.b32.xlu0 %v238, 121
  %v297 = vpop.permute.xlu0 %296
  %298 = vset.pattern.permute.xlu0 8
  %299 = vperm.xlu0 %298, %v21
  %v300 = vpop.permute.xlu0 %299
  %v302 = vmul.f32 %v300, %v297
  %v303 = vadd.f32 %v295, %v302
  %v304 = vpack.c.bf16 %v21, %v21
  %v305 = vpack.c.bf16 %v303, %v303
  %307 = vrot.lane.b32.xlu0 %v304, 119
  %v308 = vpop.permute.xlu0 %307
  %vm309 = vcmask 64512
  %v311 = vsel %vm309, %v308, 0
  %vm313 = vcmask 1043456
  %v315 = vsel %vm313, %v305, 0
  %317 = vmatprep.subr.bf16.mxu0 0
  %318 = vmatpush1.bf16.msra.mxu0 %v315
  %319 = vmatprep.subr.bf16.mxu0 0
  %320 = vmatpush1.bf16.msra.mxu0 0
  %321 = vmatprep.subr.bf16.mxu0 0
  %322 = vmatpush1.bf16.msra.mxu0 0
  %323 = vmatprep.subr.bf16.mxu0 0
  %324 = vmatpush1.bf16.msra.mxu0 0
  %325 = vmatprep.subr.bf16.mxu0 0
  %326 = vmatpush1.bf16.msra.mxu0 0
  %327 = vmatprep.subr.bf16.mxu0 0
  %328 = vmatpush1.bf16.msra.mxu0 0
  %329 = vmatprep.subr.bf16.mxu0 0
  %330 = vmatpush1.bf16.msra.mxu0 0
  %331 = vmatprep.subr.bf16.mxu0 0
  %332 = vmatpush1.bf16.msra.mxu0 0
  %333 = vmatprep.subr.bf16.mxu0 0
  %334 = vmatpush1.bf16.msra.mxu0 0
  %335 = vmatprep.subr.bf16.mxu0 0
  %336 = vmatpush1.bf16.msra.mxu0 0
  %337 = vmatprep.subr.bf16.mxu0 0
  %338 = vmatpush1.bf16.msra.mxu0 0
  %339 = vmatprep.subr.bf16.mxu0 0
  %340 = vmatpush1.bf16.msra.mxu0 0
  %341 = vmatprep.subr.bf16.mxu0 0
  %342 = vmatpush1.bf16.msra.mxu0 0
  %343 = vmatprep.subr.bf16.mxu0 0
  %344 = vmatpush1.bf16.msra.mxu0 0
  %345 = vmatprep.subr.bf16.mxu0 0
  %346 = vmatpush1.bf16.msra.mxu0 0
  %347 = vmatprep.subr.bf16.mxu0 0
  %348 = vmatpush1.bf16.msra.mxu0 0
  %349 = vmatprep.mubr.bf16.mxu0 0
  %350 = vmatmul.mubr.bf16.gmra.mrb[0].mxu0 %v311
  %v351 = vpop.f32.mrb[0].mxu0
  %v352 = vadd.f32 0.0, %v351
  %v353 = vpop.f32.mrb[0].mxu0
  %v354 = vpop.f32.mrb[0].mxu0
  %v355 = vpop.f32.mrb[0].mxu0
  %356 = vdwg.mxu0
  %357 = vset.pattern.permute.xlu0 17
  %358 = vperm.xlu0 %357, %v21
  %v359 = vpop.permute.xlu0 %358
  %v361 = vmul.f32 %v352, %v359
  %362 = vset.pattern.permute.xlu0 18
  %363 = vperm.xlu0 %362, %v21
  %v364 = vpop.permute.xlu0 %363
  %v366 = vadd.f32 %v361, %v364
  %vm367 = vcmp.gt.f32.partialorder %v366, 0.0
  %v368 = vmin.f32 %v366, 0.0
  %v369 = vmul.f32 %v368, 1.442695
  %v370 = vpow.pop %v369
  %v371 = vsub.f32 %v370, 1.0
  %v372 = vsel %vm367, %v366, %v371
  %v373 = vld [vmem:[%s4] sm:$0xf]
  %v374 = vld [vmem:[%s4 + $0x4] sm:$0xf]
  %v375 = vld [vmem:[%s4 + $0x8] sm:$0xf]
  %v376 = vld [vmem:[%s4 + $0xc] sm:$0xf]
  %v377 = vld [vmem:[%s4 + $0x10] sm:$0xf]
  %v378 = vld [vmem:[%s4 + $0x14] sm:$0xf]
  %v379 = vld [vmem:[%s4 + $0x18] sm:$0xf]
  %v380 = vld [vmem:[%s4 + $0x1c] sm:$0xf]
  %v381 = vld [vmem:[%s4 + $0x20] sm:$0xf]
  %v382 = vld [vmem:[%s4 + $0x24] sm:$0xf]
  %v383 = vld [vmem:[%s4 + $0x28] sm:$0xf]
  %v384 = vld [vmem:[%s4 + $0x2c] sm:$0xf]
  %v385 = vld [vmem:[%s4 + $0x30] sm:$0xf]
  %v386 = vld [vmem:[%s4 + $0x34] sm:$0xf]
  %v387 = vld [vmem:[%s4 + $0x38] sm:$0xf]
  %v388 = vld [vmem:[%s4 + $0x3c] sm:$0xf]
  %v389 = vpack.c.bf16 %v372, %v372
  %v406 = vunpack.c.l.b16 %v373
  %v407 = vunpack.c.l.b16 %v374
  %v408 = vunpack.c.l.b16 %v375
  %v409 = vunpack.c.l.b16 %v376
  %v410 = vunpack.c.l.b16 %v377
  %v411 = vunpack.c.l.b16 %v378
  %v412 = vunpack.c.l.b16 %v379
  %v413 = vunpack.c.l.b16 %v380
  %v414 = vunpack.c.l.b16 %v381
  %v415 = vunpack.c.l.b16 %v382
  %v416 = vunpack.c.l.b16 %v383
  %v417 = vunpack.c.l.b16 %v384
  %v418 = vunpack.c.l.b16 %v385
  %v419 = vunpack.c.l.b16 %v386
  %v420 = vunpack.c.l.b16 %v387
  %v421 = vunpack.c.l.b16 %v388
  %v422 = vpack.c.b16 %v407, %v406
  %v423 = vpack.c.b16 %v409, %v408
  %v424 = vpack.c.b16 %v411, %v410
  %v425 = vpack.c.b16 %v413, %v412
  %v426 = vpack.c.b16 %v415, %v414
  %v427 = vpack.c.b16 %v417, %v416
  %v428 = vpack.c.b16 %v419, %v418
  %v429 = vpack.c.b16 %v421, %v420
  %438 = vmatprep.subr.bf16.mxu0 0
  %439 = vmatpush1.bf16.msra.mxu0 %v422
  %440 = vmatprep.subr.bf16.mxu0 0
  %441 = vmatpush1.bf16.msra.mxu0 %v423
  %442 = vmatprep.subr.bf16.mxu0 0
  %443 = vmatpush1.bf16.msra.mxu0 %v424
  %444 = vmatprep.subr.bf16.mxu0 0
  %445 = vmatpush1.bf16.msra.mxu0 %v425
  %446 = vmatprep.subr.bf16.mxu0 0
  %447 = vmatpush1.bf16.msra.mxu0 %v426
  %448 = vmatprep.subr.bf16.mxu0 0
  %449 = vmatpush1.bf16.msra.mxu0 %v427
  %450 = vmatprep.subr.bf16.mxu0 0
  %451 = vmatpush1.bf16.msra.mxu0 %v428
  %452 = vmatprep.subr.bf16.mxu0 0
  %453 = vmatpush1.bf16.msra.mxu0 %v429
  %454 = vmatprep.subr.bf16.mxu0 0
  %455 = vmatpush1.bf16.msra.mxu0 0
  %456 = vmatprep.subr.bf16.mxu0 0
  %457 = vmatpush1.bf16.msra.mxu0 0
  %458 = vmatprep.subr.bf16.mxu0 0
  %459 = vmatpush1.bf16.msra.mxu0 0
  %460 = vmatprep.subr.bf16.mxu0 0
  %461 = vmatpush1.bf16.msra.mxu0 0
  %462 = vmatprep.subr.bf16.mxu0 0
  %463 = vmatpush1.bf16.msra.mxu0 0
  %464 = vmatprep.subr.bf16.mxu0 0
  %465 = vmatpush1.bf16.msra.mxu0 0
  %466 = vmatprep.subr.bf16.mxu0 0
  %467 = vmatpush1.bf16.msra.mxu0 0
  %468 = vmatprep.subr.bf16.mxu0 0
  %469 = vmatpush1.bf16.msra.mxu0 0
  %470 = vmatprep.mubr.bf16.mxu0 0
  %471 = vmatmul.mubr.bf16.gmra.mrb[0].mxu0 %v389
  %v472 = vpop.f32.mrb[0].mxu0
  %v473 = vadd.f32 0.0, %v472
  %v474 = vpop.f32.mrb[0].mxu0
  %v475 = vpop.f32.mrb[0].mxu0
  %v476 = vpop.f32.mrb[0].mxu0
  %477 = vdwg.mxu0
  %478 = vrot.lane.b32.xlu0 %v21, 109
  %v479 = vpop.permute.xlu0 %478
  %v481 = vmul.f32 %v473, %v479
  %v482 = vsel %vm309, %v481, 0.0
  %v483 = vrot.slane %v482, 4
  %v484 = vadd.f32 %v482, %v483
  %v485 = vrot.slane %v484, 2
  %v486 = vadd.f32 %v484, %v485
  %v487 = vrot.slane %v486, 1
  %v488 = vadd.f32 %v486, %v487
  %v489 = vld [vmem:[%s4 + $0x40] sm:$0xf]
  %v490 = vunpack.c.l.bf16 %v489
  %v492 = vsel %vm309, %v488, 0
  %494 = vmatprep.subr.mxu0 0.0
  %495 = vmatpush1.msra.mxu0 %v490
  %496 = vmatprep.subr.mxu0 0.0
  %497 = vmatpush1.msra.mxu0 0.0
  %498 = vmatprep.subr.mxu0 0.0
  %499 = vmatpush1.msra.mxu0 0.0
  %500 = vmatprep.subr.mxu0 0.0
  %501 = vmatpush1.msra.mxu0 0.0
  %502 = vmatprep.subr.mxu0 0.0
  %503 = vmatpush1.msra.mxu0 0.0
  %504 = vmatprep.subr.mxu0 0.0
  %505 = vmatpush1.msra.mxu0 0.0
  %506 = vmatprep.subr.mxu0 0.0
  %507 = vmatpush1.msra.mxu0 0.0
  %508 = vmatprep.subr.mxu0 0.0
  %509 = vmatpush1.msra.mxu0 0.0
  %510 = vmatprep.subr.mxu0 0.0
  %511 = vmatpush1.msra.mxu0 0.0
  %512 = vmatprep.subr.mxu0 0.0
  %513 = vmatpush1.msra.mxu0 0.0
  %514 = vmatprep.subr.mxu0 0.0
  %515 = vmatpush1.msra.mxu0 0.0
  %516 = vmatprep.subr.mxu0 0.0
  %517 = vmatpush1.msra.mxu0 0.0
  %518 = vmatprep.subr.mxu0 0.0
  %519 = vmatpush1.msra.mxu0 0.0
  %520 = vmatprep.subr.mxu0 0.0
  %521 = vmatpush1.msra.mxu0 0.0
  %522 = vmatprep.subr.mxu0 0.0
  %523 = vmatpush1.msra.mxu0 0.0
  %524 = vmatprep.subr.mxu0 0.0
  %525 = vmatpush1.msra.mxu0 0.0
  %526 = vmatprep.subr.mxu0 0.0
  %527 = vmatpush1.msra.mxu0 0.0
  %528 = vmatprep.subr.mxu0 0.0
  %529 = vmatpush1.msra.mxu0 0.0
  %530 = vmatprep.subr.mxu0 0.0
  %531 = vmatpush1.msra.mxu0 0.0
  %532 = vmatprep.subr.mxu0 0.0
  %533 = vmatpush1.msra.mxu0 0.0
  %534 = vmatprep.subr.mxu0 0.0
  %535 = vmatpush1.msra.mxu0 0.0
  %536 = vmatprep.subr.mxu0 0.0
  %537 = vmatpush1.msra.mxu0 0.0
  %538 = vmatprep.subr.mxu0 0.0
  %539 = vmatpush1.msra.mxu0 0.0
  %540 = vmatprep.subr.mxu0 0.0
  %541 = vmatpush1.msra.mxu0 0.0
  %542 = vmatprep.subr.mxu0 0.0
  %543 = vmatpush1.msra.mxu0 0.0
  %544 = vmatprep.subr.mxu0 0.0
  %545 = vmatpush1.msra.mxu0 0.0
  %546 = vmatprep.subr.mxu0 0.0
  %547 = vmatpush1.msra.mxu0 0.0
  %548 = vmatprep.subr.mxu0 0.0
  %549 = vmatpush1.msra.mxu0 0.0
  %550 = vmatprep.subr.mxu0 0.0
  %551 = vmatpush1.msra.mxu0 0.0
  %552 = vmatprep.subr.mxu0 0.0
  %553 = vmatpush1.msra.mxu0 0.0
  %554 = vmatprep.subr.mxu0 0.0
  %555 = vmatpush1.msra.mxu0 0.0
  %556 = vmatprep.subr.mxu0 0.0
  %557 = vmatpush1.msra.mxu0 0.0
  %558 = vmatprep.mubr.f32.mxu0 0.0
  %559 = vmatmul.mubr.f32.gmra.mrb[0].mxu0 %v492
  %v560 = vpop.f32.mrb[0].mxu0
  %v561 = vadd.f32 0.0, %v560
  %v562 = vpop.f32.mrb[0].mxu0
  %563 = vdwg.mxu0
  %vm564 = vcmask 24576
  %565 = vst.msk [vmem:[%s5] sm:$0x1] %vm564, %v561
  // Predicated region
  $region22: #{eegnet_forward.1} parent=0 // pred_check
    _
  $region23: #{eegnet_forward.1} parent=0 // pred_check_branch
    %567 = sbr.rel (0) target = $region25
  $region24: #{eegnet_forward.1} parent=0 // pred_region
    _
  $region25: #{eegnet_forward.1} parent=0 // pred_fallthru
    _
  // Predicated region
  $region26: #{eegnet_forward.1} parent=0 // pred_check
    _
  $region27: #{eegnet_forward.1} parent=0 // pred_check_branch
    %569 = sbr.rel (0) target = $region29
  $region28: #{eegnet_forward.1} parent=0 // pred_region
    _
  $region29: #{eegnet_forward.1} parent=0 // pred_fallthru
    _

</llo_original>
